<compile_context>
chip_gen: v5e
topology: v5e:2x2
jax: 0.10.0
libtpu: 0.0.40
codegen_flags: <defaults>
</compile_context>

<pallas_src>
import functools

import jax
import jax.numpy as jnp
from jax.experimental import pallas as pl
from jax.experimental.pallas import tpu as pltpu

BN_EPS = 1e-5
_STATS_LANES = 128


def _conv_taps(x, masks, H, W):
    """x: (Cin, H*W); masks: (9, H*W) {0,1} f32 -> (9*Cin, H*W) masked 3x3 tap stack.

    Row block (ky*3+kx)*Cin..+Cin holds x shifted so lane (h*W + w) carries
    x[:, (h+ky-1)*W + (w+kx-1)], zeroed where the source falls outside the image
    (== the zero padding of the stride-1, pad-1 transposed conv).
    """
    HW = H * W
    pieces = []
    for ky in range(3):
        for kx in range(3):
            k = ky * 3 + kx
            shift = (-((ky - 1) * W + (kx - 1))) % HW          # static
            shifted = jnp.roll(x, shift, axis=1) if shift else x
            if ky == 1 and kx == 1:
                pieces.append(shifted)                          # center tap: mask is all-ones
            else:
                pieces.append(shifted * masks[k:k + 1, :])
    return jnp.concatenate(pieces, axis=0)                      # (9*Cin, H*W)


def _stats_kernel(x_ref, w_ref, m_ref, stats_ref, *, H, W, Cout):
    """Pass 1: conv (no bias) -> per-image, per-channel sum / sum-of-squares partials."""
    x = x_ref[0]                                                # (Cin, H*W) f32
    conv = jnp.dot(w_ref[...], _conv_taps(x, m_ref[...], H, W),
                   preferred_element_type=jnp.float32)          # (Cout, H*W)
    s = jnp.sum(conv, axis=1, keepdims=True)                    # (Cout, 1)
    sq = jnp.sum(conv * conv, axis=1, keepdims=True)            # (Cout, 1)
    pad = jnp.zeros((Cout, _STATS_LANES - 2), jnp.float32)
    stats_ref[0] = jnp.concatenate([s, sq, pad], axis=1)        # full (Cout, 128) tile store


def _apply_kernel(x_ref, w_ref, m_ref, scale_ref, shift_ref, o_ref, *, H, W):
    """Pass 2: conv -> folded BN scale/shift -> ReLU -> exact f32 identity skip -> store."""
    x = x_ref[0]                                                # (Cin, H*W) f32
    conv = jnp.dot(w_ref[...], _conv_taps(x, m_ref[...], H, W),
                   preferred_element_type=jnp.float32)          # (Cout, H*W)
    y = jnp.maximum(conv * scale_ref[...] + shift_ref[...], 0.0)
    skip = jnp.concatenate([x, x], axis=0)                      # duplicate identity into both halves
    o_ref[0] = (y + skip).astype(o_ref.dtype)                   # single lane-dense NCHW store


def _vmem_limit_bytes(Cin, Cout, HW):
    """Explicit VMEM budgeting (review: honest accounting vs v7x 64 MiB / v5e-v6e 128 MiB)."""
    blocks = 2 * ((Cin + Cout) * HW + 9 * HW + Cout * _STATS_LANES
                  + Cout * 9 * Cin + 2 * Cout) * 4              # double-buffered I/O blocks
    temps = (10 * Cin + 3 * Cout) * HW * 4                      # tap stack + conv + skip temps
    need = blocks + temps + (1 << 20)
    try:
        cap = int(getattr(pltpu.get_tpu_info(), "vmem_capacity_bytes", 64 << 20))
    except Exception:
        cap = 64 << 20
    limit = int(min(max(2 * need, 32 << 20), (cap * 3) // 4))
    assert need <= limit, (
        "per-image working set exceeds the VMEM budget; tile the H*W lane axis "
        f"(need={need} bytes, limit={limit} bytes)")
    return limit


def skip_block_up(x_nchw, wt, bias, gamma, beta):
    """Forward pass of SkipBlockUP (out_ch == 2*in_ch, upscale=False, skip_connections=True).

    x_nchw : (N, Cin, H, W) float32
    wt     : ConvTranspose2d weight, shape (Cin, Cout, 3, 3)
    bias, gamma, beta : (Cout,)
    returns (N, Cout, H, W) float32
    """
    N, Cin, H, W = x_nchw.shape
    Cout = wt.shape[1]
    assert Cout == 2 * Cin, "only the out_ch == 2*in_ch branch of SkipBlockUP is implemented"
    del bias  # exactly cancelled by training-mode BatchNorm mean subtraction

    f32 = jnp.float32
    HW = H * W

    # Native NCHW memory order; only free reshapes (no transpose / pad / halo materialization).
    x_planes = x_nchw.reshape(N, Cin, HW).astype(f32)

    # ConvTranspose2d(3x3, s=1, p=1) == cross-correlation with the flipped kernel, pad 1.
    # w_stk[oc, (ky*3+kx)*Cin + ic] = flip(wt)[ic, oc, ky, kx]
    w_flip = jnp.flip(wt, axis=(2, 3)).astype(f32)                         # (Cin, Cout, 3, 3)
    w_stk = jnp.transpose(w_flip, (2, 3, 0, 1)).reshape(9 * Cin, Cout).T   # (Cout, 9*Cin)

    # Static per-tap validity masks (image-boundary / conv-padding zeros), tiny constant input.
    hh = jnp.arange(HW, dtype=jnp.int32) // W
    ww = jnp.arange(HW, dtype=jnp.int32) % W
    mask_rows = []
    for ky in range(3):
        for kx in range(3):
            dy, dx = ky - 1, kx - 1
            ok = ((hh + dy >= 0) & (hh + dy <= H - 1) &
                  (ww + dx >= 0) & (ww + dx <= W - 1))
            mask_rows.append(ok.astype(f32))
    masks = jnp.stack(mask_rows, axis=0)                                   # (9, H*W)

    cparams = pltpu.CompilerParams(dimension_semantics=("parallel",),
                                   vmem_limit_bytes=_vmem_limit_bytes(Cin, Cout, HW))
    conv_flops = 2 * N * Cout * 9 * Cin * HW

    # --- pass 1: streamed conv -> per-image partial BN statistics (tiny output) ----------
    stats = pl.pallas_call(
        functools.partial(_stats_kernel, H=H, W=W, Cout=Cout),
        out_shape=jax.ShapeDtypeStruct((N, Cout, _STATS_LANES), f32),
        grid_spec=pl.GridSpec(
            grid=(N,),
            in_specs=[
                pl.BlockSpec((1, Cin, HW), lambda n: (n, 0, 0)),
                pl.BlockSpec((Cout, 9 * Cin), lambda n: (0, 0)),
                pl.BlockSpec((9, HW), lambda n: (0, 0)),
            ],
            out_specs=pl.BlockSpec((1, Cout, _STATS_LANES), lambda n: (n, 0, 0)),
        ),
        compiler_params=cparams,
        cost_estimate=pl.CostEstimate(
            flops=conv_flops, transcendentals=0,
            bytes_accessed=4 * (N * Cin * HW + Cout * 9 * Cin + 9 * HW
                                + N * Cout * _STATS_LANES)),
    )(x_planes, w_stk, masks)

    # Finalize batch stats (tiny, XLA) and fold BN affine into per-channel scale / shift.
    # NOTE: E[x^2] - mean^2 in f32 (as v2); switch to centered sums if tolerances tighten.
    tot = jnp.sum(stats, axis=0)                                  # (Cout, 128)
    count = N * HW
    mean = tot[:, 0] / count
    var = tot[:, 1] / count - mean * mean                         # biased variance
    inv_std = jax.lax.rsqrt(var + BN_EPS)
    scale_c = gamma.astype(f32) * inv_std
    shift_c = beta.astype(f32) - mean * scale_c
    scale = scale_c.reshape(Cout, 1)
    shift = shift_c.reshape(Cout, 1)

    # --- pass 2: conv -> BN -> ReLU -> identity skip, single lane-dense NCHW store -------
    out = pl.pallas_call(
        functools.partial(_apply_kernel, H=H, W=W),
        out_shape=jax.ShapeDtypeStruct((N, Cout, HW), f32),
        grid_spec=pl.GridSpec(
            grid=(N,),
            in_specs=[
                pl.BlockSpec((1, Cin, HW), lambda n: (n, 0, 0)),
                pl.BlockSpec((Cout, 9 * Cin), lambda n: (0, 0)),
                pl.BlockSpec((9, HW), lambda n: (0, 0)),
                pl.BlockSpec((Cout, 1), lambda n: (0, 0)),
                pl.BlockSpec((Cout, 1), lambda n: (0, 0)),
            ],
            out_specs=pl.BlockSpec((1, Cout, HW), lambda n: (n, 0, 0)),
        ),
        compiler_params=cparams,
        cost_estimate=pl.CostEstimate(
            flops=conv_flops + 4 * N * Cout * HW, transcendentals=0,
            bytes_accessed=4 * (N * Cin * HW + Cout * 9 * Cin + 9 * HW + 2 * Cout
                                + N * Cout * HW)),
    )(x_planes, w_stk, masks, scale, shift)

    return out.reshape(N, Cout, H, W)                             # free reshape, already NCHW


def reference(x_nchw, wt, bias, gamma, beta):
    """Pure-JAX reference of the same forward pass (for verification)."""
    N, Cin, H, W = x_nchw.shape
    w_eq = jnp.flip(wt, axis=(2, 3))                 # (Cin, Cout, 3, 3)
    w_conv = jnp.transpose(w_eq, (1, 0, 2, 3))       # (Cout, Cin, 3, 3), cross-correlation
    y = jax.lax.conv_general_dilated(
        x_nchw, w_conv, window_strides=(1, 1), padding=((1, 1), (1, 1)),
        dimension_numbers=("NCHW", "OIHW", "NCHW"))
    y = y + bias[None, :, None, None]
    mean = jnp.mean(y, axis=(0, 2, 3), keepdims=True)
    var = jnp.mean((y - mean) ** 2, axis=(0, 2, 3), keepdims=True)
    y = (y - mean) * jax.lax.rsqrt(var + BN_EPS)
    y = y * gamma[None, :, None, None] + beta[None, :, None, None]
    y = jnp.maximum(y, 0.0)
    y = y.at[:, :Cin].add(x_nchw)
    y = y.at[:, Cin:].add(x_nchw)
    return y


if __name__ == "__main__":
    key = jax.random.PRNGKey(0)
    k_x, k_w, k_b, k_g, k_be = jax.random.split(key, 5)

    N, Cin, H, W = 2, 4, 16, 16
    Cout = 2 * Cin

    x = jax.random.normal(k_x, (N, Cin, H, W), dtype=jnp.float32)
    wt = 0.1 * jax.random.normal(k_w, (Cin, Cout, 3, 3), dtype=jnp.float32)  # ConvTranspose2d weight
    bias = 0.05 * jax.random.normal(k_b, (Cout,), dtype=jnp.float32)
    gamma = 1.0 + 0.1 * jax.random.normal(k_g, (Cout,), dtype=jnp.float32)
    beta = 0.1 * jax.random.normal(k_be, (Cout,), dtype=jnp.float32)

    out = jax.jit(skip_block_up)(x, wt, bias, gamma, beta)
    out = jax.block_until_ready(out)

    ref = jax.block_until_ready(reference(x, wt, bias, gamma, beta))
    assert out.shape == (N, Cout, H, W), out.shape
    assert jnp.allclose(out, ref, rtol=3e-4, atol=3e-4), float(jnp.max(jnp.abs(out - ref)))

    print("KERNEL_OK")
</pallas_src>

<mosaic_0001>
module attributes {stable_mosaic.version = 11 : i64} {
  func.func @_stats_kernel(%arg0: i32, %arg1: memref<1x4x256xf32, #tpu.memory_space<vmem>>, %arg2: memref<8x36xf32, #tpu.memory_space<vmem>>, %arg3: memref<9x256xf32, #tpu.memory_space<vmem>>, %arg4: memref<1x8x128xf32, #tpu.memory_space<vmem>>) attributes {dimension_semantics = [#tpu.dimension_semantics<parallel>], iteration_bounds = array<i64: 2>, scalar_prefetch = 0 : i64, scratch_operands = 0 : i64, tpu.core_type = #tpu.core_type<tc>, window_params = [{transform_indices = @transform_0, window_bounds = array<i64: 1, 4, 256>}, {pipeline_mode = #tpu.pipeline_mode<synchronous>, transform_indices = @transform_1, window_bounds = array<i64: 8, 36>}, {pipeline_mode = #tpu.pipeline_mode<synchronous>, transform_indices = @transform_2, window_bounds = array<i64: 9, 256>}, {transform_indices = @transform_3, window_bounds = array<i64: 1, 8, 128>}]} {
    %c0 = arith.constant 0 : index
    %c0_0 = arith.constant 0 : index
    %c0_1 = arith.constant 0 : index
    %0 = vector.load %arg1[%c0, %c0_0, %c0_1] : memref<1x4x256xf32, #tpu.memory_space<vmem>>, vector<1x4x256xf32>
    %1 = vector.shape_cast %0 : vector<1x4x256xf32> to vector<4x256xf32>
    %c0_2 = arith.constant 0 : index
    %c0_3 = arith.constant 0 : index
    %2 = vector.load %arg2[%c0_2, %c0_3] : memref<8x36xf32, #tpu.memory_space<vmem>>, vector<8x36xf32>
    %c0_4 = arith.constant 0 : index
    %c0_5 = arith.constant 0 : index
    %3 = vector.load %arg3[%c0_4, %c0_5] : memref<9x256xf32, #tpu.memory_space<vmem>>, vector<9x256xf32>
    %4 = vector.extract_strided_slice %1 {offsets = [0, 239], sizes = [4, 17], strides = [1, 1]} : vector<4x256xf32> to vector<4x17xf32>
    %5 = vector.extract_strided_slice %1 {offsets = [0, 0], sizes = [4, 239], strides = [1, 1]} : vector<4x256xf32> to vector<4x239xf32>
    %6 = tpu.concatenate %4, %5 in 1 : vector<4x17xf32>, vector<4x239xf32> -> vector<4x256xf32>
    %7 = vector.extract_strided_slice %3 {offsets = [0, 0], sizes = [1, 256], strides = [1, 1]} : vector<9x256xf32> to vector<1x256xf32>
    %8 = vector.broadcast %7 : vector<1x256xf32> to vector<4x256xf32>
    %9 = arith.mulf %6, %8 : vector<4x256xf32>
    %10 = vector.extract_strided_slice %1 {offsets = [0, 240], sizes = [4, 16], strides = [1, 1]} : vector<4x256xf32> to vector<4x16xf32>
    %11 = vector.extract_strided_slice %1 {offsets = [0, 0], sizes = [4, 240], strides = [1, 1]} : vector<4x256xf32> to vector<4x240xf32>
    %12 = tpu.concatenate %10, %11 in 1 : vector<4x16xf32>, vector<4x240xf32> -> vector<4x256xf32>
    %13 = vector.extract_strided_slice %3 {offsets = [1, 0], sizes = [1, 256], strides = [1, 1]} : vector<9x256xf32> to vector<1x256xf32>
    %14 = vector.broadcast %13 : vector<1x256xf32> to vector<4x256xf32>
    %15 = arith.mulf %12, %14 : vector<4x256xf32>
    %16 = vector.extract_strided_slice %1 {offsets = [0, 241], sizes = [4, 15], strides = [1, 1]} : vector<4x256xf32> to vector<4x15xf32>
    %17 = vector.extract_strided_slice %1 {offsets = [0, 0], sizes = [4, 241], strides = [1, 1]} : vector<4x256xf32> to vector<4x241xf32>
    %18 = tpu.concatenate %16, %17 in 1 : vector<4x15xf32>, vector<4x241xf32> -> vector<4x256xf32>
    %19 = vector.extract_strided_slice %3 {offsets = [2, 0], sizes = [1, 256], strides = [1, 1]} : vector<9x256xf32> to vector<1x256xf32>
    %20 = vector.broadcast %19 : vector<1x256xf32> to vector<4x256xf32>
    %21 = arith.mulf %18, %20 : vector<4x256xf32>
    %22 = vector.extract_strided_slice %1 {offsets = [0, 255], sizes = [4, 1], strides = [1, 1]} : vector<4x256xf32> to vector<4x1xf32>
    %23 = vector.extract_strided_slice %1 {offsets = [0, 0], sizes = [4, 255], strides = [1, 1]} : vector<4x256xf32> to vector<4x255xf32>
    %24 = tpu.concatenate %22, %23 in 1 : vector<4x1xf32>, vector<4x255xf32> -> vector<4x256xf32>
    %25 = vector.extract_strided_slice %3 {offsets = [3, 0], sizes = [1, 256], strides = [1, 1]} : vector<9x256xf32> to vector<1x256xf32>
    %26 = vector.broadcast %25 : vector<1x256xf32> to vector<4x256xf32>
    %27 = arith.mulf %24, %26 : vector<4x256xf32>
    %28 = vector.extract_strided_slice %1 {offsets = [0, 1], sizes = [4, 255], strides = [1, 1]} : vector<4x256xf32> to vector<4x255xf32>
    %29 = vector.extract_strided_slice %1 {offsets = [0, 0], sizes = [4, 1], strides = [1, 1]} : vector<4x256xf32> to vector<4x1xf32>
    %30 = tpu.concatenate %28, %29 in 1 : vector<4x255xf32>, vector<4x1xf32> -> vector<4x256xf32>
    %31 = vector.extract_strided_slice %3 {offsets = [5, 0], sizes = [1, 256], strides = [1, 1]} : vector<9x256xf32> to vector<1x256xf32>
    %32 = vector.broadcast %31 : vector<1x256xf32> to vector<4x256xf32>
    %33 = arith.mulf %30, %32 : vector<4x256xf32>
    %34 = vector.extract_strided_slice %1 {offsets = [0, 15], sizes = [4, 241], strides = [1, 1]} : vector<4x256xf32> to vector<4x241xf32>
    %35 = vector.extract_strided_slice %1 {offsets = [0, 0], sizes = [4, 15], strides = [1, 1]} : vector<4x256xf32> to vector<4x15xf32>
    %36 = tpu.concatenate %34, %35 in 1 : vector<4x241xf32>, vector<4x15xf32> -> vector<4x256xf32>
    %37 = vector.extract_strided_slice %3 {offsets = [6, 0], sizes = [1, 256], strides = [1, 1]} : vector<9x256xf32> to vector<1x256xf32>
    %38 = vector.broadcast %37 : vector<1x256xf32> to vector<4x256xf32>
    %39 = arith.mulf %36, %38 : vector<4x256xf32>
    %40 = vector.extract_strided_slice %1 {offsets = [0, 16], sizes = [4, 240], strides = [1, 1]} : vector<4x256xf32> to vector<4x240xf32>
    %41 = vector.extract_strided_slice %1 {offsets = [0, 0], sizes = [4, 16], strides = [1, 1]} : vector<4x256xf32> to vector<4x16xf32>
    %42 = tpu.concatenate %40, %41 in 1 : vector<4x240xf32>, vector<4x16xf32> -> vector<4x256xf32>
    %43 = vector.extract_strided_slice %3 {offsets = [7, 0], sizes = [1, 256], strides = [1, 1]} : vector<9x256xf32> to vector<1x256xf32>
    %44 = vector.broadcast %43 : vector<1x256xf32> to vector<4x256xf32>
    %45 = arith.mulf %42, %44 : vector<4x256xf32>
    %46 = vector.extract_strided_slice %1 {offsets = [0, 17], sizes = [4, 239], strides = [1, 1]} : vector<4x256xf32> to vector<4x239xf32>
    %47 = vector.extract_strided_slice %1 {offsets = [0, 0], sizes = [4, 17], strides = [1, 1]} : vector<4x256xf32> to vector<4x17xf32>
    %48 = tpu.concatenate %46, %47 in 1 : vector<4x239xf32>, vector<4x17xf32> -> vector<4x256xf32>
    %49 = vector.extract_strided_slice %3 {offsets = [8, 0], sizes = [1, 256], strides = [1, 1]} : vector<9x256xf32> to vector<1x256xf32>
    %50 = vector.broadcast %49 : vector<1x256xf32> to vector<4x256xf32>
    %51 = arith.mulf %48, %50 : vector<4x256xf32>
    %52 = tpu.concatenate %9, %15, %21, %27, %1, %33, %39, %45, %51 in 0 : vector<4x256xf32>, vector<4x256xf32>, vector<4x256xf32>, vector<4x256xf32>, vector<4x256xf32>, vector<4x256xf32>, vector<4x256xf32>, vector<4x256xf32>, vector<4x256xf32> -> vector<36x256xf32>
    %cst = arith.constant dense<0.000000e+00> : vector<8x256xf32>
    %53 = tpu.matmul %2, %52, %cst {dimension_numbers = #tpu.dot_dimension_numbers<[1], [0], [0], [1], [0, 0, 1, 1], [], []>} : vector<8x36xf32>, vector<36x256xf32>, vector<8x256xf32> -> vector<8x256xf32>
    %cst_6 = arith.constant dense<0.000000e+00> : vector<8xf32>
    %54 = vector.multi_reduction <add>, %53, %cst_6 [1] : vector<8x256xf32> to vector<8xf32>
    %55 = vector.shape_cast %54 : vector<8xf32> to vector<8x1xf32>
    %56 = arith.mulf %53, %53 : vector<8x256xf32>
    %cst_7 = arith.constant dense<0.000000e+00> : vector<8xf32>
    %57 = vector.multi_reduction <add>, %56, %cst_7 [1] : vector<8x256xf32> to vector<8xf32>
    %58 = vector.shape_cast %57 : vector<8xf32> to vector<8x1xf32>
    %cst_8 = arith.constant 0.000000e+00 : f32
    %59 = vector.broadcast %cst_8 : f32 to vector<8x126xf32>
    %60 = tpu.concatenate %55, %58, %59 in 1 : vector<8x1xf32>, vector<8x1xf32>, vector<8x126xf32> -> vector<8x128xf32>
    %c0_9 = arith.constant 0 : index
    %c0_10 = arith.constant 0 : index
    %c0_11 = arith.constant 0 : index
    %61 = vector.load %arg4[%c0_9, %c0_10, %c0_11] : memref<1x8x128xf32, #tpu.memory_space<vmem>>, vector<1x8x128xf32>
    %62 = vector.shape_cast %61 : vector<1x8x128xf32> to vector<8x128xf32>
    %63 = vector.shape_cast %60 : vector<8x128xf32> to vector<1x8x128xf32>
    tpu.vector_store %arg4[%c0_9, %c0_10, %c0_11], %63 {strides = array<i32>} : memref<1x8x128xf32, #tpu.memory_space<vmem>>, vector<1x8x128xf32>,
    return
  }
  func.func @transform_0(%arg0: i32) -> (i32, i32, i32) {
    %c0_i32 = arith.constant 0 : i32
    %c0_i32_0 = arith.constant 0 : i32
    %c0_i32_1 = arith.constant 0 : i32
    return %arg0, %c0_i32, %c0_i32_0 : i32, i32, i32
  }
  func.func @transform_1(%arg0: i32) -> (i32, i32) {
    %c0_i32 = arith.constant 0 : i32
    %c0_i32_0 = arith.constant 0 : i32
    %c0_i32_1 = arith.constant 0 : i32
    return %c0_i32, %c0_i32_0 : i32, i32
  }
  func.func @transform_2(%arg0: i32) -> (i32, i32) {
    %c0_i32 = arith.constant 0 : i32
    %c0_i32_0 = arith.constant 0 : i32
    %c0_i32_1 = arith.constant 0 : i32
    return %c0_i32, %c0_i32_0 : i32, i32
  }
  func.func @transform_3(%arg0: i32) -> (i32, i32, i32) {
    %c0_i32 = arith.constant 0 : i32
    %c0_i32_0 = arith.constant 0 : i32
    %c0_i32_1 = arith.constant 0 : i32
    return %arg0, %c0_i32, %c0_i32_0 : i32, i32, i32
  }
}

module attributes {stable_mosaic.version = 11 : i64} {
  func.func @_apply_kernel(%arg0: i32, %arg1: memref<1x4x256xf32, #tpu.memory_space<vmem>>, %arg2: memref<8x36xf32, #tpu.memory_space<vmem>>, %arg3: memref<9x256xf32, #tpu.memory_space<vmem>>, %arg4: memref<8x1xf32, #tpu.memory_space<vmem>>, %arg5: memref<8x1xf32, #tpu.memory_space<vmem>>, %arg6: memref<1x8x256xf32, #tpu.memory_space<vmem>>) attributes {dimension_semantics = [#tpu.dimension_semantics<parallel>], iteration_bounds = array<i64: 2>, scalar_prefetch = 0 : i64, scratch_operands = 0 : i64, tpu.core_type = #tpu.core_type<tc>, window_params = [{transform_indices = @transform_0, window_bounds = array<i64: 1, 4, 256>}, {pipeline_mode = #tpu.pipeline_mode<synchronous>, transform_indices = @transform_1, window_bounds = array<i64: 8, 36>}, {pipeline_mode = #tpu.pipeline_mode<synchronous>, transform_indices = @transform_2, window_bounds = array<i64: 9, 256>}, {pipeline_mode = #tpu.pipeline_mode<synchronous>, transform_indices = @transform_3, window_bounds = array<i64: 8, 1>}, {pipeline_mode = #tpu.pipeline_mode<synchronous>, transform_indices = @transform_4, window_bounds = array<i64: 8, 1>}, {transform_indices = @transform_5, window_bounds = array<i64: 1, 8, 256>}]} {
    %c0 = arith.constant 0 : index
    %c0_0 = arith.constant 0 : index
    %c0_1 = arith.constant 0 : index
    %0 = vector.load %arg1[%c0, %c0_0, %c0_1] : memref<1x4x256xf32, #tpu.memory_space<vmem>>, vector<1x4x256xf32>
    %1 = vector.shape_cast %0 : vector<1x4x256xf32> to vector<4x256xf32>
    %c0_2 = arith.constant 0 : index
    %c0_3 = arith.constant 0 : index
    %2 = vector.load %arg2[%c0_2, %c0_3] : memref<8x36xf32, #tpu.memory_space<vmem>>, vector<8x36xf32>
    %c0_4 = arith.constant 0 : index
    %c0_5 = arith.constant 0 : index
    %3 = vector.load %arg3[%c0_4, %c0_5] : memref<9x256xf32, #tpu.memory_space<vmem>>, vector<9x256xf32>
    %4 = vector.extract_strided_slice %1 {offsets = [0, 239], sizes = [4, 17], strides = [1, 1]} : vector<4x256xf32> to vector<4x17xf32>
    %5 = vector.extract_strided_slice %1 {offsets = [0, 0], sizes = [4, 239], strides = [1, 1]} : vector<4x256xf32> to vector<4x239xf32>
    %6 = tpu.concatenate %4, %5 in 1 : vector<4x17xf32>, vector<4x239xf32> -> vector<4x256xf32>
    %7 = vector.extract_strided_slice %3 {offsets = [0, 0], sizes = [1, 256], strides = [1, 1]} : vector<9x256xf32> to vector<1x256xf32>
    %8 = vector.broadcast %7 : vector<1x256xf32> to vector<4x256xf32>
    %9 = arith.mulf %6, %8 : vector<4x256xf32>
    %10 = vector.extract_strided_slice %1 {offsets = [0, 240], sizes = [4, 16], strides = [1, 1]} : vector<4x256xf32> to vector<4x16xf32>
    %11 = vector.extract_strided_slice %1 {offsets = [0, 0], sizes = [4, 240], strides = [1, 1]} : vector<4x256xf32> to vector<4x240xf32>
    %12 = tpu.concatenate %10, %11 in 1 : vector<4x16xf32>, vector<4x240xf32> -> vector<4x256xf32>
    %13 = vector.extract_strided_slice %3 {offsets = [1, 0], sizes = [1, 256], strides = [1, 1]} : vector<9x256xf32> to vector<1x256xf32>
    %14 = vector.broadcast %13 : vector<1x256xf32> to vector<4x256xf32>
    %15 = arith.mulf %12, %14 : vector<4x256xf32>
    %16 = vector.extract_strided_slice %1 {offsets = [0, 241], sizes = [4, 15], strides = [1, 1]} : vector<4x256xf32> to vector<4x15xf32>
    %17 = vector.extract_strided_slice %1 {offsets = [0, 0], sizes = [4, 241], strides = [1, 1]} : vector<4x256xf32> to vector<4x241xf32>
    %18 = tpu.concatenate %16, %17 in 1 : vector<4x15xf32>, vector<4x241xf32> -> vector<4x256xf32>
    %19 = vector.extract_strided_slice %3 {offsets = [2, 0], sizes = [1, 256], strides = [1, 1]} : vector<9x256xf32> to vector<1x256xf32>
    %20 = vector.broadcast %19 : vector<1x256xf32> to vector<4x256xf32>
    %21 = arith.mulf %18, %20 : vector<4x256xf32>
    %22 = vector.extract_strided_slice %1 {offsets = [0, 255], sizes = [4, 1], strides = [1, 1]} : vector<4x256xf32> to vector<4x1xf32>
    %23 = vector.extract_strided_slice %1 {offsets = [0, 0], sizes = [4, 255], strides = [1, 1]} : vector<4x256xf32> to vector<4x255xf32>
    %24 = tpu.concatenate %22, %23 in 1 : vector<4x1xf32>, vector<4x255xf32> -> vector<4x256xf32>
    %25 = vector.extract_strided_slice %3 {offsets = [3, 0], sizes = [1, 256], strides = [1, 1]} : vector<9x256xf32> to vector<1x256xf32>
    %26 = vector.broadcast %25 : vector<1x256xf32> to vector<4x256xf32>
    %27 = arith.mulf %24, %26 : vector<4x256xf32>
    %28 = vector.extract_strided_slice %1 {offsets = [0, 1], sizes = [4, 255], strides = [1, 1]} : vector<4x256xf32> to vector<4x255xf32>
    %29 = vector.extract_strided_slice %1 {offsets = [0, 0], sizes = [4, 1], strides = [1, 1]} : vector<4x256xf32> to vector<4x1xf32>
    %30 = tpu.concatenate %28, %29 in 1 : vector<4x255xf32>, vector<4x1xf32> -> vector<4x256xf32>
    %31 = vector.extract_strided_slice %3 {offsets = [5, 0], sizes = [1, 256], strides = [1, 1]} : vector<9x256xf32> to vector<1x256xf32>
    %32 = vector.broadcast %31 : vector<1x256xf32> to vector<4x256xf32>
    %33 = arith.mulf %30, %32 : vector<4x256xf32>
    %34 = vector.extract_strided_slice %1 {offsets = [0, 15], sizes = [4, 241], strides = [1, 1]} : vector<4x256xf32> to vector<4x241xf32>
    %35 = vector.extract_strided_slice %1 {offsets = [0, 0], sizes = [4, 15], strides = [1, 1]} : vector<4x256xf32> to vector<4x15xf32>
    %36 = tpu.concatenate %34, %35 in 1 : vector<4x241xf32>, vector<4x15xf32> -> vector<4x256xf32>
    %37 = vector.extract_strided_slice %3 {offsets = [6, 0], sizes = [1, 256], strides = [1, 1]} : vector<9x256xf32> to vector<1x256xf32>
    %38 = vector.broadcast %37 : vector<1x256xf32> to vector<4x256xf32>
    %39 = arith.mulf %36, %38 : vector<4x256xf32>
    %40 = vector.extract_strided_slice %1 {offsets = [0, 16], sizes = [4, 240], strides = [1, 1]} : vector<4x256xf32> to vector<4x240xf32>
    %41 = vector.extract_strided_slice %1 {offsets = [0, 0], sizes = [4, 16], strides = [1, 1]} : vector<4x256xf32> to vector<4x16xf32>
    %42 = tpu.concatenate %40, %41 in 1 : vector<4x240xf32>, vector<4x16xf32> -> vector<4x256xf32>
    %43 = vector.extract_strided_slice %3 {offsets = [7, 0], sizes = [1, 256], strides = [1, 1]} : vector<9x256xf32> to vector<1x256xf32>
    %44 = vector.broadcast %43 : vector<1x256xf32> to vector<4x256xf32>
    %45 = arith.mulf %42, %44 : vector<4x256xf32>
    %46 = vector.extract_strided_slice %1 {offsets = [0, 17], sizes = [4, 239], strides = [1, 1]} : vector<4x256xf32> to vector<4x239xf32>
    %47 = vector.extract_strided_slice %1 {offsets = [0, 0], sizes = [4, 17], strides = [1, 1]} : vector<4x256xf32> to vector<4x17xf32>
    %48 = tpu.concatenate %46, %47 in 1 : vector<4x239xf32>, vector<4x17xf32> -> vector<4x256xf32>
    %49 = vector.extract_strided_slice %3 {offsets = [8, 0], sizes = [1, 256], strides = [1, 1]} : vector<9x256xf32> to vector<1x256xf32>
    %50 = vector.broadcast %49 : vector<1x256xf32> to vector<4x256xf32>
    %51 = arith.mulf %48, %50 : vector<4x256xf32>
    %52 = tpu.concatenate %9, %15, %21, %27, %1, %33, %39, %45, %51 in 0 : vector<4x256xf32>, vector<4x256xf32>, vector<4x256xf32>, vector<4x256xf32>, vector<4x256xf32>, vector<4x256xf32>, vector<4x256xf32>, vector<4x256xf32>, vector<4x256xf32> -> vector<36x256xf32>
    %cst = arith.constant dense<0.000000e+00> : vector<8x256xf32>
    %53 = tpu.matmul %2, %52, %cst {dimension_numbers = #tpu.dot_dimension_numbers<[1], [0], [0], [1], [0, 0, 1, 1], [], []>} : vector<8x36xf32>, vector<36x256xf32>, vector<8x256xf32> -> vector<8x256xf32>
    %c0_6 = arith.constant 0 : index
    %c0_7 = arith.constant 0 : index
    %54 = vector.load %arg4[%c0_6, %c0_7] : memref<8x1xf32, #tpu.memory_space<vmem>>, vector<8x1xf32>
    %55 = vector.broadcast %54 : vector<8x1xf32> to vector<8x256xf32>
    %56 = arith.mulf %53, %55 : vector<8x256xf32>
    %c0_8 = arith.constant 0 : index
    %c0_9 = arith.constant 0 : index
    %57 = vector.load %arg5[%c0_8, %c0_9] : memref<8x1xf32, #tpu.memory_space<vmem>>, vector<8x1xf32>
    %58 = vector.broadcast %57 : vector<8x1xf32> to vector<8x256xf32>
    %59 = arith.addf %56, %58 : vector<8x256xf32>
    %cst_10 = arith.constant 0.000000e+00 : f32
    %60 = vector.broadcast %cst_10 : f32 to vector<8x256xf32>
    %61 = arith.maximumf %59, %60 : vector<8x256xf32>
    %62 = tpu.concatenate %1, %1 in 0 : vector<4x256xf32>, vector<4x256xf32> -> vector<8x256xf32>
    %63 = arith.addf %61, %62 : vector<8x256xf32>
    %c0_11 = arith.constant 0 : index
    %c0_12 = arith.constant 0 : index
    %c0_13 = arith.constant 0 : index
    %64 = vector.load %arg6[%c0_11, %c0_12, %c0_13] : memref<1x8x256xf32, #tpu.memory_space<vmem>>, vector<1x8x256xf32>
    %65 = vector.shape_cast %64 : vector<1x8x256xf32> to vector<8x256xf32>
    %66 = vector.shape_cast %63 : vector<8x256xf32> to vector<1x8x256xf32>
    tpu.vector_store %arg6[%c0_11, %c0_12, %c0_13], %66 {strides = array<i32>} : memref<1x8x256xf32, #tpu.memory_space<vmem>>, vector<1x8x256xf32>,
    return
  }
  func.func @transform_0(%arg0: i32) -> (i32, i32, i32) {
    %c0_i32 = arith.constant 0 : i32
    %c0_i32_0 = arith.constant 0 : i32
    %c0_i32_1 = arith.constant 0 : i32
    return %arg0, %c0_i32, %c0_i32_0 : i32, i32, i32
  }
  func.func @transform_1(%arg0: i32) -> (i32, i32) {
    %c0_i32 = arith.constant 0 : i32
    %c0_i32_0 = arith.constant 0 : i32
    %c0_i32_1 = arith.constant 0 : i32
    return %c0_i32, %c0_i32_0 : i32, i32
  }
  func.func @transform_2(%arg0: i32) -> (i32, i32) {
    %c0_i32 = arith.constant 0 : i32
    %c0_i32_0 = arith.constant 0 : i32
    %c0_i32_1 = arith.constant 0 : i32
    return %c0_i32, %c0_i32_0 : i32, i32
  }
  func.func @transform_3(%arg0: i32) -> (i32, i32) {
    %c0_i32 = arith.constant 0 : i32
    %c0_i32_0 = arith.constant 0 : i32
    %c0_i32_1 = arith.constant 0 : i32
    return %c0_i32, %c0_i32_0 : i32, i32
  }
  func.func @transform_4(%arg0: i32) -> (i32, i32) {
    %c0_i32 = arith.constant 0 : i32
    %c0_i32_0 = arith.constant 0 : i32
    %c0_i32_1 = arith.constant 0 : i32
    return %c0_i32, %c0_i32_0 : i32, i32
  }
  func.func @transform_5(%arg0: i32) -> (i32, i32, i32) {
    %c0_i32 = arith.constant 0 : i32
    %c0_i32_0 = arith.constant 0 : i32
    %c0_i32_1 = arith.constant 0 : i32
    return %arg0, %c0_i32, %c0_i32_0 : i32, i32, i32
  }
}

</mosaic_0001>

<llo_original>
// kernel: skip_block_up.2
$region0: #{skip_block_up.2}
  #allocation0 [shape = 'u32[]', space=smem, size = 0x4, offset = 0x4, fixed_abs, tag = 'smem constant byte address 0x4 - core index']
  #allocation1 [shape = 'u32[72,128]{1,0:T(1,128)}', space=vmem, size = 0x9000, scoped, tag = 'internal scratch']
  %s0 = inlined_call_operand.vmem [shape: f32[2,4,256], index: 0, kind: input, shape index: {}]
  %s1 = inlined_call_operand.vmem [shape: f32[8,36], index: 1, kind: input, shape index: {}]
  %s2 = inlined_call_operand.vmem [shape: f32[9,256], index: 2, kind: input, shape index: {}]
  %s3 = inlined_call_operand.vmem [shape: f32[2,8,128], index: 3, kind: output, shape index: {}]
  %s4 = sld [smem:[#allocation0]]
  $region45: #{skip_block_up.2} parent=0
    _
  %s6 = ssub.s32 1, %s4
  %s7 = scalar_select 0, %s6, %s4
  loop: start=0, step=1, limit=4
  $region2: #{skip_block_up.2} parent=0 // loop_pre_header
    _
  $region3: #{skip_block_up.2} parent=0 // loop_header
    %s9 = sphi 0, %s13
    %p10 = scmp.ge.s32.totalorder %s9, 4
    %s19 = sphi 0, %s21
    %s22 = sphi 0, %s19
    %s23 = sphi 0, %s22
    %s39 = sphi 0, %s23
    %s43 = sphi 0, %s43
    %s45 = sphi 0, %s43
    %s46 = sphi 0, %s45
    %s60 = sphi 0, %s46
    %s64 = sphi 0, %s64
    %s66 = sphi 0, %s64
    %s67 = sphi 0, %s66
    %s81 = sphi 0, %s67
    %s87 = sphi 0, %s89
    %s90 = sphi 0, %s87
    %s91 = sphi 0, %s90
    %s107 = sphi 0, %s91
  $region4: #{skip_block_up.2} parent=0 // loop_header_branch
    %12 = sbr.rel (%p10) target = $region8
  $region5: #{skip_block_up.2} parent=0 // loop_body
    %s14 = ssub.s32 %s9, 1
    %s15 = ssub.s32 %s9, 2
    %s16 = sadd.s32 %s9, 1
    %s17 = ssub.s32 %s9, %s16
    %p18 = scmp.eq.s32.totalorder %s17, 0
    %s20 = sadd.s32 %s19, 1
    %s21 = scalar_select %p18, %s19, %s20
    %p24 = pneg %p18
    %p25 = scmp.eq.s32.totalorder %s9, 1
    %p26 = por %p24, %p25
    %p27 = scmp.ne.s32.totalorder %s19, %s22
    %p28 = scmp.eq.s32.totalorder %s9, 0
    %p29 = por %p27, %p28
    %p30 = scmp.ne.s32.totalorder %s19, %s22
    %p31 = scmp.eq.s32.totalorder %s14, 1
    %p32 = por %p30, %p31
    %p33 = scmp.ne.s32.totalorder %s22, %s23
    %p34 = scmp.eq.s32.totalorder %s14, 0
    %p35 = por %p33, %p34
    %p36 = scmp.ne.s32.totalorder %s22, %s23
    %p37 = scmp.eq.s32.totalorder %s15, 1
    %p38 = por %p36, %p37
    %p40 = scmp.ne.s32.totalorder %s23, %s39
    %p41 = scmp.eq.s32.totalorder %s15, 0
    %p42 = por %p40, %p41
    %s44 = sadd.s32 %s43, 1
    %p47 = scmp.eq.s32.totalorder %s9, 1
    %p48 = scmp.ne.s32.totalorder %s43, %s45
    %p49 = scmp.eq.s32.totalorder %s9, 0
    %p50 = por %p48, %p49
    %p51 = scmp.ne.s32.totalorder %s43, %s45
    %p52 = scmp.eq.s32.totalorder %s14, 1
    %p53 = por %p51, %p52
    %p54 = scmp.ne.s32.totalorder %s45, %s46
    %p55 = scmp.eq.s32.totalorder %s14, 0
    %p56 = por %p54, %p55
    %p57 = scmp.ne.s32.totalorder %s45, %s46
    %p58 = scmp.eq.s32.totalorder %s15, 1
    %p59 = por %p57, %p58
    %p61 = scmp.ne.s32.totalorder %s46, %s60
    %p62 = scmp.eq.s32.totalorder %s15, 0
    %p63 = por %p61, %p62
    %s65 = sadd.s32 %s64, 1
    %p68 = scmp.eq.s32.totalorder %s9, 1
    %p69 = scmp.ne.s32.totalorder %s64, %s66
    %p70 = scmp.eq.s32.totalorder %s9, 0
    %p71 = por %p69, %p70
    %p72 = scmp.ne.s32.totalorder %s64, %s66
    %p73 = scmp.eq.s32.totalorder %s14, 1
    %p74 = por %p72, %p73
    %p75 = scmp.ne.s32.totalorder %s66, %s67
    %p76 = scmp.eq.s32.totalorder %s14, 0
    %p77 = por %p75, %p76
    %p78 = scmp.ne.s32.totalorder %s66, %s67
    %p79 = scmp.eq.s32.totalorder %s15, 1
    %p80 = por %p78, %p79
    %p82 = scmp.ne.s32.totalorder %s67, %s81
    %p83 = scmp.eq.s32.totalorder %s15, 0
    %p84 = por %p82, %p83
    %s85 = ssub.s32 %s9, %s16
    %p86 = scmp.eq.s32.totalorder %s85, 0
    %s88 = sadd.s32 %s87, 1
    %s89 = scalar_select %p86, %s87, %s88
    %p92 = pneg %p86
    %p93 = scmp.eq.s32.totalorder %s9, 1
    %p94 = por %p92, %p93
    %p95 = scmp.ne.s32.totalorder %s87, %s90
    %p96 = scmp.eq.s32.totalorder %s9, 0
    %p97 = por %p95, %p96
    %p98 = scmp.ne.s32.totalorder %s87, %s90
    %p99 = scmp.eq.s32.totalorder %s14, 1
    %p100 = por %p98, %p99
    %p101 = scmp.ne.s32.totalorder %s90, %s91
    %p102 = scmp.eq.s32.totalorder %s14, 0
    %p103 = por %p101, %p102
    %p104 = scmp.ne.s32.totalorder %s90, %s91
    %p105 = scmp.eq.s32.totalorder %s15, 1
    %p106 = por %p104, %p105
    %p108 = scmp.ne.s32.totalorder %s91, %s107
    %p109 = scmp.eq.s32.totalorder %s15, 0
    %p110 = por %p108, %p109
    %p111 = scmp.le.s32.totalorder 1, %s9
    %p112 = scmp.lt.s32.totalorder %s9, 3
    %p113 = pnand %p111, %p112
    %p114 = pneg %p113
    // Predicated region
    $region9: #{skip_block_up.2} parent=5 // pred_check
      _
    $region10: #{skip_block_up.2} parent=5 // pred_check_branch
      %116 = sbr.rel (%p113) target = $region12
    $region11: #{skip_block_up.2} parent=5 // pred_region
      %s117 = ssub.s32 %s9, 1
      // Predicated region
      $region13: #{skip_block_up.2} parent=11 // pred_check
        %p118 = pneg %p56
      $region14: #{skip_block_up.2} parent=11 // pred_check_branch
        %120 = sbr.rel (%p118) target = $region16
      $region15: #{skip_block_up.2} parent=11 // pred_region
        _
      $region16: #{skip_block_up.2} parent=11 // pred_fallthru
        _
      // Predicated region
      $region17: #{skip_block_up.2} parent=11 // pred_check
        %p121 = pneg %p77
      $region18: #{skip_block_up.2} parent=11 // pred_check_branch
        %123 = sbr.rel (%p121) target = $region20
      $region19: #{skip_block_up.2} parent=11 // pred_region
        _
      $region20: #{skip_block_up.2} parent=11 // pred_fallthru
        _
    $region12: #{skip_block_up.2} parent=5 // pred_fallthru
      _
    %p124 = scmp.lt.s32.totalorder %s9, 2
    // Predicated region
    $region21: #{skip_block_up.2} parent=5 // pred_check
      %p125 = pneg %p124
    $region22: #{skip_block_up.2} parent=5 // pred_check_branch
      %127 = sbr.rel (%p125) target = $region24
    $region23: #{skip_block_up.2} parent=5 // pred_region
      // Predicated region
      $region25: #{skip_block_up.2} parent=23 // pred_check
        %p128 = pneg %p29
      $region26: #{skip_block_up.2} parent=23 // pred_check_branch
        %130 = sbr.rel (%p128) target = $region28
      $region27: #{skip_block_up.2} parent=23 // pred_region
        %p131 = scmp.lt.s32.totalorder %s9, 1
        %s132 = scalar_select %p131, %s9, 1
        %s133 = smul.addr %s132, 2
        %s134 = smul.addr %s133, 4
        %s135 = scalar_lea.vmem %s0, %s134
      $region28: #{skip_block_up.2} parent=23 // pred_fallthru
        _
    $region24: #{skip_block_up.2} parent=5 // pred_fallthru
      _
    %p136 = scmp.le.s32.totalorder 1, %s9
    %p137 = scmp.lt.s32.totalorder %s9, 3
    %p138 = pnand %p136, %p137
    %p139 = pneg %p138
    // Predicated region
    $region29: #{skip_block_up.2} parent=5 // pred_check
      _
    $region30: #{skip_block_up.2} parent=5 // pred_check_branch
      %141 = sbr.rel (%p138) target = $region32
    $region31: #{skip_block_up.2} parent=5 // pred_region
      %s142 = ssub.s32 %s9, 1
      %p143 = scmp.lt.s32.totalorder %s14, 1
      %s144 = scalar_select %p143, %s14, 1
      %s145 = smul.addr %s144, 2
      %s146 = smul.addr %s145, 4
      %s147 = scalar_lea.vmem %s0, %s146
      %p148 = pneg %p35
      %p149 = pneg %p32
      %p150 = pneg %p56
      %p151 = pneg %p53
      %p152 = pneg %p77
      %p153 = pneg %p74
      %p154 = pneg %p103
      %p155 = pneg %p100
      %p156 = scmp.lt.s32.totalorder %s14, 1
      %s157 = scalar_select %p156, %s14, 1
      %s158 = smul.addr %s157, 8
      %s159 = scalar_lea.vmem %s3, %s158
      %p160 = scmp.lt.s32.totalorder %s14, 1
      %s161 = scalar_select %p160, %s14, 1
      %s162 = smul.addr %s161, 2
      %s163 = smul.addr %s162, 4
      %s164 = scalar_lea.vmem %s0, %s163
      %p165 = scmp.lt.s32.totalorder %s14, 1
      %s166 = scalar_select %p165, %s14, 1
      %s167 = smul.addr %s166, 8
      %s168 = scalar_lea.vmem %s3, %s167
      %v169 = vld [vmem:[%s164] sm:$0xff]
      %v170 = vld [vmem:[%s1] sm:$0xff]
      %v171 = vld [vmem:[%s2] sm:$0xff]
      %v172 = vld [vmem:[%s2 + $0x8] sm:$0xff]
      %v173 = vld [vmem:[%s2 + $0x10] sm:$0x1]
      %v174 = vld [vmem:[%s2 + $0x18] sm:$0x1]
      %176 = vst [vmem:[#allocation1] ss:$2 sm:$0xff] %v169
      %v177 = vld.sshfl [vmem:[#allocation1 + $0x8] sm:$0xff pattern:$0x75316420]
      %178 = vrot.lane.b32.xlu0 %v177, 17
      %v179 = vpop.permute.xlu0 %178
      %181 = vst [vmem:[#allocation1] ss:$2 sm:$0xff] %v169
      %v182 = vld.sshfl [vmem:[#allocation1] sm:$0xff pattern:$0x75316420]
      %v183 = vld.sshfl [vmem:[#allocation1 + $0x8] sm:$0xff pattern:$0x75316420]
      %184 = vrot.lane.b32.xlu0 %v182, 17
      %v185 = vpop.permute.xlu0 %184
      %186 = vrot.lane.b32.xlu0 %v183, 17
      %v187 = vpop.permute.xlu0 %186
      %vm188 = vcmask 138240
      %v189 = vsel %vm188, %v185, %v187
      %v192 = vsel %vm188, %v179, %v185
      %v193 = vperm.slane %v171, 0
      %v194 = vperm.slane %v172, 0
      %v195 = vmul.f32 %v192, %v193
      %v196 = vmul.f32 %v189, %v194
      %197 = vst [vmem:[#allocation1] ss:$2 sm:$0xff] %v169
      %v198 = vld.sshfl [vmem:[#allocation1 + $0x8] sm:$0xff pattern:$0x75316420]
      %199 = vrot.lane.b32.xlu0 %v198, 16
      %v200 = vpop.permute.xlu0 %199
      %202 = vst [vmem:[#allocation1] ss:$2 sm:$0xff] %v169
      %v203 = vld.sshfl [vmem:[#allocation1] sm:$0xff pattern:$0x75316420]
      %v204 = vld.sshfl [vmem:[#allocation1 + $0x8] sm:$0xff pattern:$0x75316420]
      %205 = vrot.lane.b32.xlu0 %v203, 16
      %v206 = vpop.permute.xlu0 %205
      %207 = vrot.lane.b32.xlu0 %v204, 16
      %v208 = vpop.permute.xlu0 %207
      %vm209 = vcmask 130048
      %v210 = vsel %vm209, %v206, %v208
      %v213 = vsel %vm209, %v200, %v206
      %v214 = vperm.slane %v171, 1
      %v215 = vperm.slane %v172, 1
      %v216 = vmul.f32 %v213, %v214
      %v217 = vmul.f32 %v210, %v215
      %218 = vst [vmem:[#allocation1] ss:$2 sm:$0xff] %v169
      %v219 = vld.sshfl [vmem:[#allocation1 + $0x8] sm:$0xff pattern:$0x75316420]
      %220 = vrot.lane.b32.xlu0 %v219, 15
      %v221 = vpop.permute.xlu0 %220
      %223 = vst [vmem:[#allocation1] ss:$2 sm:$0xff] %v169
      %v224 = vld.sshfl [vmem:[#allocation1] sm:$0xff pattern:$0x75316420]
      %v225 = vld.sshfl [vmem:[#allocation1 + $0x8] sm:$0xff pattern:$0x75316420]
      %226 = vrot.lane.b32.xlu0 %v224, 15
      %v227 = vpop.permute.xlu0 %226
      %228 = vrot.lane.b32.xlu0 %v225, 15
      %v229 = vpop.permute.xlu0 %228
      %vm230 = vcmask 121856
      %v231 = vsel %vm230, %v227, %v229
      %v234 = vsel %vm230, %v221, %v227
      %v235 = vperm.slane %v171, 2
      %v236 = vperm.slane %v172, 2
      %v237 = vmul.f32 %v234, %v235
      %v238 = vmul.f32 %v231, %v236
      %239 = vst [vmem:[#allocation1] ss:$2 sm:$0xff] %v169
      %v240 = vld.sshfl [vmem:[#allocation1 + $0x8] sm:$0xff pattern:$0x75316420]
      %241 = vrot.lane.b32.xlu0 %v240, 1
      %v242 = vpop.permute.xlu0 %241
      %244 = vst [vmem:[#allocation1] ss:$2 sm:$0xff] %v169
      %v245 = vld.sshfl [vmem:[#allocation1] sm:$0xff pattern:$0x75316420]
      %v246 = vld.sshfl [vmem:[#allocation1 + $0x8] sm:$0xff pattern:$0x75316420]
      %247 = vrot.lane.b32.xlu0 %v245, 1
      %v248 = vpop.permute.xlu0 %247
      %249 = vrot.lane.b32.xlu0 %v246, 1
      %v250 = vpop.permute.xlu0 %249
      %vm251 = vcmask 7168
      %v252 = vsel %vm251, %v248, %v250
      %v255 = vsel %vm251, %v242, %v248
      %v256 = vperm.slane %v171, 3
      %v257 = vperm.slane %v172, 3
      %v258 = vmul.f32 %v255, %v256
      %v259 = vmul.f32 %v252, %v257
      %260 = vst [vmem:[#allocation1] ss:$2 sm:$0xff] %v169
      %v261 = vld.sshfl [vmem:[#allocation1] sm:$0xff pattern:$0x75316420]
      %v262 = vld.sshfl [vmem:[#allocation1 + $0x8] sm:$0xff pattern:$0x75316420]
      %263 = vrot.lane.b32.xlu0 %v261, 127
      %v264 = vpop.permute.xlu0 %263
      %265 = vrot.lane.b32.xlu0 %v262, 127
      %v266 = vpop.permute.xlu0 %265
      %vm267 = vcmask 1039360
      %v268 = vsel %vm267, %v264, %v266
      %271 = vst [vmem:[#allocation1] ss:$2 sm:$0xff] %v169
      %v272 = vld.sshfl [vmem:[#allocation1] sm:$0xff pattern:$0x75316420]
      %273 = vrot.lane.b32.xlu0 %v272, 127
      %v274 = vpop.permute.xlu0 %273
      %v276 = vsel %vm267, %v266, %v274
      %v277 = vperm.slane %v171, 5
      %v278 = vperm.slane %v172, 5
      %v279 = vmul.f32 %v268, %v277
      %v280 = vmul.f32 %v276, %v278
      %281 = vst [vmem:[#allocation1] ss:$2 sm:$0xff] %v169
      %v282 = vld.sshfl [vmem:[#allocation1] sm:$0xff pattern:$0x75316420]
      %v283 = vld.sshfl [vmem:[#allocation1 + $0x8] sm:$0xff pattern:$0x75316420]
      %284 = vrot.lane.b32.xlu0 %v282, 113
      %v285 = vpop.permute.xlu0 %284
      %286 = vrot.lane.b32.xlu0 %v283, 113
      %v287 = vpop.permute.xlu0 %286
      %vm288 = vcmask 924672
      %v289 = vsel %vm288, %v285, %v287
      %292 = vst [vmem:[#allocation1] ss:$2 sm:$0xff] %v169
      %v293 = vld.sshfl [vmem:[#allocation1] sm:$0xff pattern:$0x75316420]
      %294 = vrot.lane.b32.xlu0 %v293, 113
      %v295 = vpop.permute.xlu0 %294
      %v297 = vsel %vm288, %v287, %v295
      %v298 = vperm.slane %v171, 6
      %v299 = vperm.slane %v172, 6
      %v300 = vmul.f32 %v289, %v298
      %v301 = vmul.f32 %v297, %v299
      %302 = vst [vmem:[#allocation1] ss:$2 sm:$0xff] %v169
      %v303 = vld.sshfl [vmem:[#allocation1] sm:$0xff pattern:$0x75316420]
      %v304 = vld.sshfl [vmem:[#allocation1 + $0x8] sm:$0xff pattern:$0x75316420]
      %305 = vrot.lane.b32.xlu0 %v303, 112
      %v306 = vpop.permute.xlu0 %305
      %307 = vrot.lane.b32.xlu0 %v304, 112
      %v308 = vpop.permute.xlu0 %307
      %vm309 = vcmask 916480
      %v310 = vsel %vm309, %v306, %v308
      %313 = vst [vmem:[#allocation1] ss:$2 sm:$0xff] %v169
      %v314 = vld.sshfl [vmem:[#allocation1] sm:$0xff pattern:$0x75316420]
      %315 = vrot.lane.b32.xlu0 %v314, 112
      %v316 = vpop.permute.xlu0 %315
      %v318 = vsel %vm309, %v308, %v316
      %v319 = vperm.slane %v171, 7
      %v320 = vperm.slane %v172, 7
      %v321 = vmul.f32 %v310, %v319
      %v322 = vmul.f32 %v318, %v320
      %323 = vst [vmem:[#allocation1] ss:$2 sm:$0xff] %v169
      %v324 = vld.sshfl [vmem:[#allocation1] sm:$0xff pattern:$0x75316420]
      %v325 = vld.sshfl [vmem:[#allocation1 + $0x8] sm:$0xff pattern:$0x75316420]
      %326 = vrot.lane.b32.xlu0 %v324, 111
      %v327 = vpop.permute.xlu0 %326
      %328 = vrot.lane.b32.xlu0 %v325, 111
      %v329 = vpop.permute.xlu0 %328
      %vm330 = vcmask 908288
      %v331 = vsel %vm330, %v327, %v329
      %334 = vst [vmem:[#allocation1] ss:$2 sm:$0xff] %v169
      %v335 = vld.sshfl [vmem:[#allocation1] sm:$0xff pattern:$0x75316420]
      %336 = vrot.lane.b32.xlu0 %v335, 111
      %v337 = vpop.permute.xlu0 %336
      %v339 = vsel %vm330, %v329, %v337
      %v340 = vperm.slane %v173, 0
      %v341 = vperm.slane %v174, 0
      %v342 = vmul.f32 %v331, %v340
      %v343 = vmul.f32 %v339, %v341
      %v346 = vrot.slane %v216, 4
      %v347 = vrot.slane %v217, 4
      %v352 = vrot.slane %v258, 4
      %v353 = vrot.slane %v259, 4
      %356 = vst [vmem:[#allocation1] ss:$2 sm:$0xff] %v169
      %v357 = vld.sshfl [vmem:[#allocation1] sm:$0xff pattern:$0x75316420]
      %v358 = vld.sshfl [vmem:[#allocation1 + $0x8] sm:$0xff pattern:$0x75316420]
      %v363 = vrot.slane %v279, 4
      %v364 = vrot.slane %v280, 4
      %v369 = vrot.slane %v321, 4
      %v370 = vrot.slane %v322, 4
      %vm373 = vcmask 1043456
      %v374 = vsel %vm373, %v195, %v346
      %v375 = vsel %vm373, %v196, %v347
      %v376 = vsel %vm373, %v237, %v352
      %v377 = vsel %vm373, %v238, %v353
      %v378 = vsel %vm373, %v357, %v363
      %v379 = vsel %vm373, %v358, %v364
      %v380 = vsel %vm373, %v300, %v369
      %v381 = vsel %vm373, %v301, %v370
      %vm382 = vcmask 293888
      %v384 = vsel %vm382, %v170, 0
      %v387 = vsel %vm373, %v342, 0
      %v390 = vsel %vm373, %v343, 0
      %392 = vmatpush.msra.mxu0 0.0
      %393 = vmatpush.msra.mxu0 0.0
      %394 = vmatpush.msra.mxu0 0.0
      %395 = vmatpush.msra.mxu0 0.0
      %396 = vmatpush.msra.mxu0 0.0
      %397 = vmatpush.msra.mxu0 0.0
      %398 = vmatpush.msra.mxu0 0.0
      %399 = vmatpush.msra.mxu0 0.0
      %400 = vmatpush.msra.mxu0 0.0
      %401 = vmatpush.msra.mxu0 0.0
      %402 = vmatpush.msra.mxu0 0.0
      %403 = vmatpush.msra.mxu0 %v387
      %404 = vmatpush.msra.mxu0 %v380
      %405 = vmatpush.msra.mxu0 %v378
      %406 = vmatpush.msra.mxu0 %v376
      %407 = vmatpush.msra.mxu0 %v374
      %408 = vmatmul.f32.gmra.mxu0 %v384
      %v409 = vpop.f32.mrf.mxu0
      %v410 = vadd.f32 0.0, %v409
      %411 = vdwg.mxu0
      %412 = vmatpush.msra.mxu0 0.0
      %413 = vmatpush.msra.mxu0 0.0
      %414 = vmatpush.msra.mxu0 0.0
      %415 = vmatpush.msra.mxu0 0.0
      %416 = vmatpush.msra.mxu0 0.0
      %417 = vmatpush.msra.mxu0 0.0
      %418 = vmatpush.msra.mxu0 0.0
      %419 = vmatpush.msra.mxu0 0.0
      %420 = vmatpush.msra.mxu0 0.0
      %421 = vmatpush.msra.mxu0 0.0
      %422 = vmatpush.msra.mxu0 0.0
      %423 = vmatpush.msra.mxu0 %v390
      %424 = vmatpush.msra.mxu0 %v381
      %425 = vmatpush.msra.mxu0 %v379
      %426 = vmatpush.msra.mxu0 %v377
      %427 = vmatpush.msra.mxu0 %v375
      %428 = vmatmul.f32.gmra.mxu0 %v384
      %v429 = vpop.f32.mrf.mxu0
      %v430 = vadd.f32 0.0, %v429
      %431 = vdwg.mxu0
      %v432 = vadd.f32 %v410, %v430
      %433 = vadd.xlane.f32.xlu0 %v432
      %v434 = vpop.xlane.xlu0 %433
      %v435 = vmul.f32 %v410, %v410
      %v436 = vmul.f32 %v430, %v430
      %v437 = vadd.f32 %v435, %v436
      %438 = vadd.xlane.f32.xlu0 %v437
      %v439 = vpop.xlane.xlu0 %438
      %v440 = vsel %vm251, %v434, %v439
      %vm441 = vcmask 15360
      %v442 = vsel %vm441, %v440, 0.0
      %443 = vst [vmem:[%s168] sm:$0xff] %v442
      %p444 = scmp.lt.s32.totalorder %s14, 1
      %s445 = scalar_select %p444, %s14, 1
      %s446 = smul.addr %s445, 8
      %s447 = scalar_lea.vmem %s3, %s446
      // Predicated region
      $region33: #{skip_block_up.2} parent=31 // pred_check
        %p448 = pneg %p100
      $region34: #{skip_block_up.2} parent=31 // pred_check_branch
        %450 = sbr.rel (%p448) target = $region36
      $region35: #{skip_block_up.2} parent=31 // pred_region
        _
      $region36: #{skip_block_up.2} parent=31 // pred_fallthru
        _
    $region32: #{skip_block_up.2} parent=5 // pred_fallthru
      _
    %p451 = scmp.le.s32.totalorder 2, %s9
    // Predicated region
    $region37: #{skip_block_up.2} parent=5 // pred_check
      %p452 = pneg %p451
    $region38: #{skip_block_up.2} parent=5 // pred_check_branch
      %454 = sbr.rel (%p452) target = $region40
    $region39: #{skip_block_up.2} parent=5 // pred_region
      %s455 = ssub.s32 %s9, 2
      // Predicated region
      $region41: #{skip_block_up.2} parent=39 // pred_check
        %p456 = pneg %p106
      $region42: #{skip_block_up.2} parent=39 // pred_check_branch
        %458 = sbr.rel (%p456) target = $region44
      $region43: #{skip_block_up.2} parent=39 // pred_region
        %p459 = scmp.lt.s32.totalorder %s15, 1
        %s460 = scalar_select %p459, %s15, 1
        %s461 = smul.addr %s460, 8
        %s462 = scalar_lea.vmem %s3, %s461
      $region44: #{skip_block_up.2} parent=39 // pred_fallthru
        _
    $region40: #{skip_block_up.2} parent=5 // pred_fallthru
      _
  $region6: #{skip_block_up.2} parent=0 // loop_footer
    %s13 = sadd.s32 1, %s9
  $region7: #{skip_block_up.2} parent=0 // loop_footer_branch
    %8 = sbr.rel target = $region3
  $region8: #{skip_block_up.2} parent=0 // loop_exit
    _

// kernel: skip_block_up.3
$region0: #{skip_block_up.3}
  #allocation0 [shape = 'u32[]', space=smem, size = 0x4, offset = 0x4, fixed_abs, tag = 'smem constant byte address 0x4 - core index']
  #allocation1 [shape = 'u32[72,128]{1,0:T(1,128)}', space=vmem, size = 0x9000, scoped, tag = 'internal scratch']
  %s0 = inlined_call_operand.vmem [shape: f32[2,4,256], index: 0, kind: input, shape index: {}]
  %s1 = inlined_call_operand.vmem [shape: f32[8,36], index: 1, kind: input, shape index: {}]
  %s2 = inlined_call_operand.vmem [shape: f32[9,256], index: 2, kind: input, shape index: {}]
  %s3 = inlined_call_operand.vmem [shape: f32[8,1], index: 3, kind: input, shape index: {}]
  %s4 = inlined_call_operand.vmem [shape: f32[8,1], index: 4, kind: input, shape index: {}]
  %s5 = inlined_call_operand.vmem [shape: f32[2,8,256], index: 5, kind: output, shape index: {}]
  %s6 = sld [smem:[#allocation0]]
  $region53: #{skip_block_up.3} parent=0
    _
  %s8 = ssub.s32 1, %s6
  %s9 = scalar_select 0, %s8, %s6
  loop: start=0, step=1, limit=4
  $region2: #{skip_block_up.3} parent=0 // loop_pre_header
    _
  $region3: #{skip_block_up.3} parent=0 // loop_header
    %s11 = sphi 0, %s15
    %p12 = scmp.ge.s32.totalorder %s11, 4
    %s21 = sphi 0, %s23
    %s24 = sphi 0, %s21
    %s25 = sphi 0, %s24
    %s41 = sphi 0, %s25
    %s45 = sphi 0, %s45
    %s47 = sphi 0, %s45
    %s48 = sphi 0, %s47
    %s62 = sphi 0, %s48
    %s66 = sphi 0, %s66
    %s68 = sphi 0, %s66
    %s69 = sphi 0, %s68
    %s83 = sphi 0, %s69
    %s87 = sphi 0, %s87
    %s89 = sphi 0, %s87
    %s90 = sphi 0, %s89
    %s104 = sphi 0, %s90
    %s108 = sphi 0, %s108
    %s110 = sphi 0, %s108
    %s111 = sphi 0, %s110
    %s125 = sphi 0, %s111
    %s131 = sphi 0, %s133
    %s134 = sphi 0, %s131
    %s135 = sphi 0, %s134
    %s151 = sphi 0, %s135
  $region4: #{skip_block_up.3} parent=0 // loop_header_branch
    %14 = sbr.rel (%p12) target = $region8
  $region5: #{skip_block_up.3} parent=0 // loop_body
    %s16 = ssub.s32 %s11, 1
    %s17 = ssub.s32 %s11, 2
    %s18 = sadd.s32 %s11, 1
    %s19 = ssub.s32 %s11, %s18
    %p20 = scmp.eq.s32.totalorder %s19, 0
    %s22 = sadd.s32 %s21, 1
    %s23 = scalar_select %p20, %s21, %s22
    %p26 = pneg %p20
    %p27 = scmp.eq.s32.totalorder %s11, 1
    %p28 = por %p26, %p27
    %p29 = scmp.ne.s32.totalorder %s21, %s24
    %p30 = scmp.eq.s32.totalorder %s11, 0
    %p31 = por %p29, %p30
    %p32 = scmp.ne.s32.totalorder %s21, %s24
    %p33 = scmp.eq.s32.totalorder %s16, 1
    %p34 = por %p32, %p33
    %p35 = scmp.ne.s32.totalorder %s24, %s25
    %p36 = scmp.eq.s32.totalorder %s16, 0
    %p37 = por %p35, %p36
    %p38 = scmp.ne.s32.totalorder %s24, %s25
    %p39 = scmp.eq.s32.totalorder %s17, 1
    %p40 = por %p38, %p39
    %p42 = scmp.ne.s32.totalorder %s25, %s41
    %p43 = scmp.eq.s32.totalorder %s17, 0
    %p44 = por %p42, %p43
    %s46 = sadd.s32 %s45, 1
    %p49 = scmp.eq.s32.totalorder %s11, 1
    %p50 = scmp.ne.s32.totalorder %s45, %s47
    %p51 = scmp.eq.s32.totalorder %s11, 0
    %p52 = por %p50, %p51
    %p53 = scmp.ne.s32.totalorder %s45, %s47
    %p54 = scmp.eq.s32.totalorder %s16, 1
    %p55 = por %p53, %p54
    %p56 = scmp.ne.s32.totalorder %s47, %s48
    %p57 = scmp.eq.s32.totalorder %s16, 0
    %p58 = por %p56, %p57
    %p59 = scmp.ne.s32.totalorder %s47, %s48
    %p60 = scmp.eq.s32.totalorder %s17, 1
    %p61 = por %p59, %p60
    %p63 = scmp.ne.s32.totalorder %s48, %s62
    %p64 = scmp.eq.s32.totalorder %s17, 0
    %p65 = por %p63, %p64
    %s67 = sadd.s32 %s66, 1
    %p70 = scmp.eq.s32.totalorder %s11, 1
    %p71 = scmp.ne.s32.totalorder %s66, %s68
    %p72 = scmp.eq.s32.totalorder %s11, 0
    %p73 = por %p71, %p72
    %p74 = scmp.ne.s32.totalorder %s66, %s68
    %p75 = scmp.eq.s32.totalorder %s16, 1
    %p76 = por %p74, %p75
    %p77 = scmp.ne.s32.totalorder %s68, %s69
    %p78 = scmp.eq.s32.totalorder %s16, 0
    %p79 = por %p77, %p78
    %p80 = scmp.ne.s32.totalorder %s68, %s69
    %p81 = scmp.eq.s32.totalorder %s17, 1
    %p82 = por %p80, %p81
    %p84 = scmp.ne.s32.totalorder %s69, %s83
    %p85 = scmp.eq.s32.totalorder %s17, 0
    %p86 = por %p84, %p85
    %s88 = sadd.s32 %s87, 1
    %p91 = scmp.eq.s32.totalorder %s11, 1
    %p92 = scmp.ne.s32.totalorder %s87, %s89
    %p93 = scmp.eq.s32.totalorder %s11, 0
    %p94 = por %p92, %p93
    %p95 = scmp.ne.s32.totalorder %s87, %s89
    %p96 = scmp.eq.s32.totalorder %s16, 1
    %p97 = por %p95, %p96
    %p98 = scmp.ne.s32.totalorder %s89, %s90
    %p99 = scmp.eq.s32.totalorder %s16, 0
    %p100 = por %p98, %p99
    %p101 = scmp.ne.s32.totalorder %s89, %s90
    %p102 = scmp.eq.s32.totalorder %s17, 1
    %p103 = por %p101, %p102
    %p105 = scmp.ne.s32.totalorder %s90, %s104
    %p106 = scmp.eq.s32.totalorder %s17, 0
    %p107 = por %p105, %p106
    %s109 = sadd.s32 %s108, 1
    %p112 = scmp.eq.s32.totalorder %s11, 1
    %p113 = scmp.ne.s32.totalorder %s108, %s110
    %p114 = scmp.eq.s32.totalorder %s11, 0
    %p115 = por %p113, %p114
    %p116 = scmp.ne.s32.totalorder %s108, %s110
    %p117 = scmp.eq.s32.totalorder %s16, 1
    %p118 = por %p116, %p117
    %p119 = scmp.ne.s32.totalorder %s110, %s111
    %p120 = scmp.eq.s32.totalorder %s16, 0
    %p121 = por %p119, %p120
    %p122 = scmp.ne.s32.totalorder %s110, %s111
    %p123 = scmp.eq.s32.totalorder %s17, 1
    %p124 = por %p122, %p123
    %p126 = scmp.ne.s32.totalorder %s111, %s125
    %p127 = scmp.eq.s32.totalorder %s17, 0
    %p128 = por %p126, %p127
    %s129 = ssub.s32 %s11, %s18
    %p130 = scmp.eq.s32.totalorder %s129, 0
    %s132 = sadd.s32 %s131, 1
    %s133 = scalar_select %p130, %s131, %s132
    %p136 = pneg %p130
    %p137 = scmp.eq.s32.totalorder %s11, 1
    %p138 = por %p136, %p137
    %p139 = scmp.ne.s32.totalorder %s131, %s134
    %p140 = scmp.eq.s32.totalorder %s11, 0
    %p141 = por %p139, %p140
    %p142 = scmp.ne.s32.totalorder %s131, %s134
    %p143 = scmp.eq.s32.totalorder %s16, 1
    %p144 = por %p142, %p143
    %p145 = scmp.ne.s32.totalorder %s134, %s135
    %p146 = scmp.eq.s32.totalorder %s16, 0
    %p147 = por %p145, %p146
    %p148 = scmp.ne.s32.totalorder %s134, %s135
    %p149 = scmp.eq.s32.totalorder %s17, 1
    %p150 = por %p148, %p149
    %p152 = scmp.ne.s32.totalorder %s135, %s151
    %p153 = scmp.eq.s32.totalorder %s17, 0
    %p154 = por %p152, %p153
    %p155 = scmp.le.s32.totalorder 1, %s11
    %p156 = scmp.lt.s32.totalorder %s11, 3
    %p157 = pnand %p155, %p156
    %p158 = pneg %p157
    // Predicated region
    $region9: #{skip_block_up.3} parent=5 // pred_check
      _
    $region10: #{skip_block_up.3} parent=5 // pred_check_branch
      %160 = sbr.rel (%p157) target = $region12
    $region11: #{skip_block_up.3} parent=5 // pred_region
      %s161 = ssub.s32 %s11, 1
      // Predicated region
      $region13: #{skip_block_up.3} parent=11 // pred_check
        %p162 = pneg %p58
      $region14: #{skip_block_up.3} parent=11 // pred_check_branch
        %164 = sbr.rel (%p162) target = $region16
      $region15: #{skip_block_up.3} parent=11 // pred_region
        _
      $region16: #{skip_block_up.3} parent=11 // pred_fallthru
        _
      // Predicated region
      $region17: #{skip_block_up.3} parent=11 // pred_check
        %p165 = pneg %p79
      $region18: #{skip_block_up.3} parent=11 // pred_check_branch
        %167 = sbr.rel (%p165) target = $region20
      $region19: #{skip_block_up.3} parent=11 // pred_region
        _
      $region20: #{skip_block_up.3} parent=11 // pred_fallthru
        _
      // Predicated region
      $region21: #{skip_block_up.3} parent=11 // pred_check
        %p168 = pneg %p100
      $region22: #{skip_block_up.3} parent=11 // pred_check_branch
        %170 = sbr.rel (%p168) target = $region24
      $region23: #{skip_block_up.3} parent=11 // pred_region
        _
      $region24: #{skip_block_up.3} parent=11 // pred_fallthru
        _
      // Predicated region
      $region25: #{skip_block_up.3} parent=11 // pred_check
        %p171 = pneg %p121
      $region26: #{skip_block_up.3} parent=11 // pred_check_branch
        %173 = sbr.rel (%p171) target = $region28
      $region27: #{skip_block_up.3} parent=11 // pred_region
        _
      $region28: #{skip_block_up.3} parent=11 // pred_fallthru
        _
    $region12: #{skip_block_up.3} parent=5 // pred_fallthru
      _
    %p174 = scmp.lt.s32.totalorder %s11, 2
    // Predicated region
    $region29: #{skip_block_up.3} parent=5 // pred_check
      %p175 = pneg %p174
    $region30: #{skip_block_up.3} parent=5 // pred_check_branch
      %177 = sbr.rel (%p175) target = $region32
    $region31: #{skip_block_up.3} parent=5 // pred_region
      // Predicated region
      $region33: #{skip_block_up.3} parent=31 // pred_check
        %p178 = pneg %p31
      $region34: #{skip_block_up.3} parent=31 // pred_check_branch
        %180 = sbr.rel (%p178) target = $region36
      $region35: #{skip_block_up.3} parent=31 // pred_region
        %p181 = scmp.lt.s32.totalorder %s11, 1
        %s182 = scalar_select %p181, %s11, 1
        %s183 = smul.addr %s182, 2
        %s184 = smul.addr %s183, 4
        %s185 = scalar_lea.vmem %s0, %s184
      $region36: #{skip_block_up.3} parent=31 // pred_fallthru
        _
    $region32: #{skip_block_up.3} parent=5 // pred_fallthru
      _
    %p186 = scmp.le.s32.totalorder 1, %s11
    %p187 = scmp.lt.s32.totalorder %s11, 3
    %p188 = pnand %p186, %p187
    %p189 = pneg %p188
    // Predicated region
    $region37: #{skip_block_up.3} parent=5 // pred_check
      _
    $region38: #{skip_block_up.3} parent=5 // pred_check_branch
      %191 = sbr.rel (%p188) target = $region40
    $region39: #{skip_block_up.3} parent=5 // pred_region
      %s192 = ssub.s32 %s11, 1
      %p193 = scmp.lt.s32.totalorder %s16, 1
      %s194 = scalar_select %p193, %s16, 1
      %s195 = smul.addr %s194, 2
      %s196 = smul.addr %s195, 4
      %s197 = scalar_lea.vmem %s0, %s196
      %p198 = pneg %p37
      %p199 = pneg %p34
      %p200 = pneg %p58
      %p201 = pneg %p55
      %p202 = pneg %p79
      %p203 = pneg %p76
      %p204 = pneg %p100
      %p205 = pneg %p97
      %p206 = pneg %p121
      %p207 = pneg %p118
      %p208 = pneg %p147
      %p209 = pneg %p144
      %p210 = scmp.lt.s32.totalorder %s16, 1
      %s211 = scalar_select %p210, %s16, 1
      %s212 = smul.addr %s211, 2
      %s213 = smul.addr %s212, 8
      %s214 = scalar_lea.vmem %s5, %s213
      %p215 = scmp.lt.s32.totalorder %s16, 1
      %s216 = scalar_select %p215, %s16, 1
      %s217 = smul.addr %s216, 2
      %s218 = smul.addr %s217, 4
      %s219 = scalar_lea.vmem %s0, %s218
      %p220 = scmp.lt.s32.totalorder %s16, 1
      %s221 = scalar_select %p220, %s16, 1
      %s222 = smul.addr %s221, 2
      %s223 = smul.addr %s222, 8
      %s224 = scalar_lea.vmem %s5, %s223
      %v225 = vld [vmem:[%s219] sm:$0xff]
      %v226 = vld [vmem:[%s1] sm:$0xff]
      %v227 = vld [vmem:[%s2] sm:$0xff]
      %v228 = vld [vmem:[%s2 + $0x8] sm:$0xff]
      %v229 = vld [vmem:[%s2 + $0x10] sm:$0x1]
      %v230 = vld [vmem:[%s2 + $0x18] sm:$0x1]
      %232 = vst [vmem:[#allocation1] ss:$2 sm:$0xff] %v225
      %v233 = vld.sshfl [vmem:[#allocation1 + $0x8] sm:$0xff pattern:$0x75316420]
      %234 = vrot.lane.b32.xlu0 %v233, 17
      %v235 = vpop.permute.xlu0 %234
      %237 = vst [vmem:[#allocation1] ss:$2 sm:$0xff] %v225
      %v238 = vld.sshfl [vmem:[#allocation1] sm:$0xff pattern:$0x75316420]
      %v239 = vld.sshfl [vmem:[#allocation1 + $0x8] sm:$0xff pattern:$0x75316420]
      %240 = vrot.lane.b32.xlu0 %v238, 17
      %v241 = vpop.permute.xlu0 %240
      %242 = vrot.lane.b32.xlu0 %v239, 17
      %v243 = vpop.permute.xlu0 %242
      %vm244 = vcmask 138240
      %v245 = vsel %vm244, %v241, %v243
      %v248 = vsel %vm244, %v235, %v241
      %v249 = vperm.slane %v227, 0
      %v250 = vperm.slane %v228, 0
      %v251 = vmul.f32 %v248, %v249
      %v252 = vmul.f32 %v245, %v250
      %253 = vst [vmem:[#allocation1] ss:$2 sm:$0xff] %v225
      %v254 = vld.sshfl [vmem:[#allocation1 + $0x8] sm:$0xff pattern:$0x75316420]
      %255 = vrot.lane.b32.xlu0 %v254, 16
      %v256 = vpop.permute.xlu0 %255
      %258 = vst [vmem:[#allocation1] ss:$2 sm:$0xff] %v225
      %v259 = vld.sshfl [vmem:[#allocation1] sm:$0xff pattern:$0x75316420]
      %v260 = vld.sshfl [vmem:[#allocation1 + $0x8] sm:$0xff pattern:$0x75316420]
      %261 = vrot.lane.b32.xlu0 %v259, 16
      %v262 = vpop.permute.xlu0 %261
      %263 = vrot.lane.b32.xlu0 %v260, 16
      %v264 = vpop.permute.xlu0 %263
      %vm265 = vcmask 130048
      %v266 = vsel %vm265, %v262, %v264
      %v269 = vsel %vm265, %v256, %v262
      %v270 = vperm.slane %v227, 1
      %v271 = vperm.slane %v228, 1
      %v272 = vmul.f32 %v269, %v270
      %v273 = vmul.f32 %v266, %v271
      %274 = vst [vmem:[#allocation1] ss:$2 sm:$0xff] %v225
      %v275 = vld.sshfl [vmem:[#allocation1 + $0x8] sm:$0xff pattern:$0x75316420]
      %276 = vrot.lane.b32.xlu0 %v275, 15
      %v277 = vpop.permute.xlu0 %276
      %279 = vst [vmem:[#allocation1] ss:$2 sm:$0xff] %v225
      %v280 = vld.sshfl [vmem:[#allocation1] sm:$0xff pattern:$0x75316420]
      %v281 = vld.sshfl [vmem:[#allocation1 + $0x8] sm:$0xff pattern:$0x75316420]
      %282 = vrot.lane.b32.xlu0 %v280, 15
      %v283 = vpop.permute.xlu0 %282
      %284 = vrot.lane.b32.xlu0 %v281, 15
      %v285 = vpop.permute.xlu0 %284
      %vm286 = vcmask 121856
      %v287 = vsel %vm286, %v283, %v285
      %v290 = vsel %vm286, %v277, %v283
      %v291 = vperm.slane %v227, 2
      %v292 = vperm.slane %v228, 2
      %v293 = vmul.f32 %v290, %v291
      %v294 = vmul.f32 %v287, %v292
      %295 = vst [vmem:[#allocation1] ss:$2 sm:$0xff] %v225
      %v296 = vld.sshfl [vmem:[#allocation1 + $0x8] sm:$0xff pattern:$0x75316420]
      %297 = vrot.lane.b32.xlu0 %v296, 1
      %v298 = vpop.permute.xlu0 %297
      %300 = vst [vmem:[#allocation1] ss:$2 sm:$0xff] %v225
      %v301 = vld.sshfl [vmem:[#allocation1] sm:$0xff pattern:$0x75316420]
      %v302 = vld.sshfl [vmem:[#allocation1 + $0x8] sm:$0xff pattern:$0x75316420]
      %303 = vrot.lane.b32.xlu0 %v301, 1
      %v304 = vpop.permute.xlu0 %303
      %305 = vrot.lane.b32.xlu0 %v302, 1
      %v306 = vpop.permute.xlu0 %305
      %vm307 = vcmask 7168
      %v308 = vsel %vm307, %v304, %v306
      %v311 = vsel %vm307, %v298, %v304
      %v312 = vperm.slane %v227, 3
      %v313 = vperm.slane %v228, 3
      %v314 = vmul.f32 %v311, %v312
      %v315 = vmul.f32 %v308, %v313
      %316 = vst [vmem:[#allocation1] ss:$2 sm:$0xff] %v225
      %v317 = vld.sshfl [vmem:[#allocation1] sm:$0xff pattern:$0x75316420]
      %v318 = vld.sshfl [vmem:[#allocation1 + $0x8] sm:$0xff pattern:$0x75316420]
      %319 = vrot.lane.b32.xlu0 %v317, 127
      %v320 = vpop.permute.xlu0 %319
      %321 = vrot.lane.b32.xlu0 %v318, 127
      %v322 = vpop.permute.xlu0 %321
      %vm323 = vcmask 1039360
      %v324 = vsel %vm323, %v320, %v322
      %327 = vst [vmem:[#allocation1] ss:$2 sm:$0xff] %v225
      %v328 = vld.sshfl [vmem:[#allocation1] sm:$0xff pattern:$0x75316420]
      %329 = vrot.lane.b32.xlu0 %v328, 127
      %v330 = vpop.permute.xlu0 %329
      %v332 = vsel %vm323, %v322, %v330
      %v333 = vperm.slane %v227, 5
      %v334 = vperm.slane %v228, 5
      %v335 = vmul.f32 %v324, %v333
      %v336 = vmul.f32 %v332, %v334
      %337 = vst [vmem:[#allocation1] ss:$2 sm:$0xff] %v225
      %v338 = vld.sshfl [vmem:[#allocation1] sm:$0xff pattern:$0x75316420]
      %v339 = vld.sshfl [vmem:[#allocation1 + $0x8] sm:$0xff pattern:$0x75316420]
      %340 = vrot.lane.b32.xlu0 %v338, 113
      %v341 = vpop.permute.xlu0 %340
      %342 = vrot.lane.b32.xlu0 %v339, 113
      %v343 = vpop.permute.xlu0 %342
      %vm344 = vcmask 924672
      %v345 = vsel %vm344, %v341, %v343
      %348 = vst [vmem:[#allocation1] ss:$2 sm:$0xff] %v225
      %v349 = vld.sshfl [vmem:[#allocation1] sm:$0xff pattern:$0x75316420]
      %350 = vrot.lane.b32.xlu0 %v349, 113
      %v351 = vpop.permute.xlu0 %350
      %v353 = vsel %vm344, %v343, %v351
      %v354 = vperm.slane %v227, 6
      %v355 = vperm.slane %v228, 6
      %v356 = vmul.f32 %v345, %v354
      %v357 = vmul.f32 %v353, %v355
      %358 = vst [vmem:[#allocation1] ss:$2 sm:$0xff] %v225
      %v359 = vld.sshfl [vmem:[#allocation1] sm:$0xff pattern:$0x75316420]
      %v360 = vld.sshfl [vmem:[#allocation1 + $0x8] sm:$0xff pattern:$0x75316420]
      %361 = vrot.lane.b32.xlu0 %v359, 112
      %v362 = vpop.permute.xlu0 %361
      %363 = vrot.lane.b32.xlu0 %v360, 112
      %v364 = vpop.permute.xlu0 %363
      %vm365 = vcmask 916480
      %v366 = vsel %vm365, %v362, %v364
      %369 = vst [vmem:[#allocation1] ss:$2 sm:$0xff] %v225
      %v370 = vld.sshfl [vmem:[#allocation1] sm:$0xff pattern:$0x75316420]
      %371 = vrot.lane.b32.xlu0 %v370, 112
      %v372 = vpop.permute.xlu0 %371
      %v374 = vsel %vm365, %v364, %v372
      %v375 = vperm.slane %v227, 7
      %v376 = vperm.slane %v228, 7
      %v377 = vmul.f32 %v366, %v375
      %v378 = vmul.f32 %v374, %v376
      %379 = vst [vmem:[#allocation1] ss:$2 sm:$0xff] %v225
      %v380 = vld.sshfl [vmem:[#allocation1] sm:$0xff pattern:$0x75316420]
      %v381 = vld.sshfl [vmem:[#allocation1 + $0x8] sm:$0xff pattern:$0x75316420]
      %382 = vrot.lane.b32.xlu0 %v380, 111
      %v383 = vpop.permute.xlu0 %382
      %384 = vrot.lane.b32.xlu0 %v381, 111
      %v385 = vpop.permute.xlu0 %384
      %vm386 = vcmask 908288
      %v387 = vsel %vm386, %v383, %v385
      %390 = vst [vmem:[#allocation1] ss:$2 sm:$0xff] %v225
      %v391 = vld.sshfl [vmem:[#allocation1] sm:$0xff pattern:$0x75316420]
      %392 = vrot.lane.b32.xlu0 %v391, 111
      %v393 = vpop.permute.xlu0 %392
      %v395 = vsel %vm386, %v385, %v393
      %v396 = vperm.slane %v229, 0
      %v397 = vperm.slane %v230, 0
      %v398 = vmul.f32 %v387, %v396
      %v399 = vmul.f32 %v395, %v397
      %v402 = vrot.slane %v272, 4
      %v403 = vrot.slane %v273, 4
      %v408 = vrot.slane %v314, 4
      %v409 = vrot.slane %v315, 4
      %412 = vst [vmem:[#allocation1] ss:$2 sm:$0xff] %v225
      %v413 = vld.sshfl [vmem:[#allocation1] sm:$0xff pattern:$0x75316420]
      %v414 = vld.sshfl [vmem:[#allocation1 + $0x8] sm:$0xff pattern:$0x75316420]
      %v419 = vrot.slane %v335, 4
      %v420 = vrot.slane %v336, 4
      %v425 = vrot.slane %v377, 4
      %v426 = vrot.slane %v378, 4
      %vm429 = vcmask 1043456
      %v430 = vsel %vm429, %v251, %v402
      %v431 = vsel %vm429, %v252, %v403
      %v432 = vsel %vm429, %v293, %v408
      %v433 = vsel %vm429, %v294, %v409
      %v434 = vsel %vm429, %v413, %v419
      %v435 = vsel %vm429, %v414, %v420
      %v436 = vsel %vm429, %v356, %v425
      %v437 = vsel %vm429, %v357, %v426
      %vm438 = vcmask 293888
      %v440 = vsel %vm438, %v226, 0
      %v443 = vsel %vm429, %v398, 0
      %v446 = vsel %vm429, %v399, 0
      %448 = vmatpush.msra.mxu0 0.0
      %449 = vmatpush.msra.mxu0 0.0
      %450 = vmatpush.msra.mxu0 0.0
      %451 = vmatpush.msra.mxu0 0.0
      %452 = vmatpush.msra.mxu0 0.0
      %453 = vmatpush.msra.mxu0 0.0
      %454 = vmatpush.msra.mxu0 0.0
      %455 = vmatpush.msra.mxu0 0.0
      %456 = vmatpush.msra.mxu0 0.0
      %457 = vmatpush.msra.mxu0 0.0
      %458 = vmatpush.msra.mxu0 0.0
      %459 = vmatpush.msra.mxu0 %v443
      %460 = vmatpush.msra.mxu0 %v436
      %461 = vmatpush.msra.mxu0 %v434
      %462 = vmatpush.msra.mxu0 %v432
      %463 = vmatpush.msra.mxu0 %v430
      %464 = vmatmul.f32.gmra.mxu0 %v440
      %v465 = vpop.f32.mrf.mxu0
      %v466 = vadd.f32 0.0, %v465
      %467 = vdwg.mxu0
      %468 = vmatpush.msra.mxu0 0.0
      %469 = vmatpush.msra.mxu0 0.0
      %470 = vmatpush.msra.mxu0 0.0
      %471 = vmatpush.msra.mxu0 0.0
      %472 = vmatpush.msra.mxu0 0.0
      %473 = vmatpush.msra.mxu0 0.0
      %474 = vmatpush.msra.mxu0 0.0
      %475 = vmatpush.msra.mxu0 0.0
      %476 = vmatpush.msra.mxu0 0.0
      %477 = vmatpush.msra.mxu0 0.0
      %478 = vmatpush.msra.mxu0 0.0
      %479 = vmatpush.msra.mxu0 %v446
      %480 = vmatpush.msra.mxu0 %v437
      %481 = vmatpush.msra.mxu0 %v435
      %482 = vmatpush.msra.mxu0 %v433
      %483 = vmatpush.msra.mxu0 %v431
      %484 = vmatmul.f32.gmra.mxu0 %v440
      %v485 = vpop.f32.mrf.mxu0
      %v486 = vadd.f32 0.0, %v485
      %487 = vdwg.mxu0
      %v488 = vld [vmem:[%s3] sm:$0xff]
      %490 = vset.pattern.permute.xlu0 0
      %491 = vperm.xlu0 %490, %v488
      %v492 = vpop.permute.xlu0 %491
      %v494 = vmul.f32 %v466, %v492
      %v495 = vmul.f32 %v486, %v492
      %v496 = vld [vmem:[%s4] sm:$0xff]
      %498 = vset.pattern.permute.xlu0 0
      %499 = vperm.xlu0 %498, %v496
      %v500 = vpop.permute.xlu0 %499
      %v502 = vadd.f32 %v494, %v500
      %v503 = vadd.f32 %v495, %v500
      %v504 = vmax.f32 %v502, 0.0
      %v505 = vmax.f32 %v503, 0.0
      %506 = vst [vmem:[#allocation1] ss:$2 sm:$0xff] %v225
      %v507 = vld.sshfl [vmem:[#allocation1] sm:$0xff pattern:$0x75316420]
      %v508 = vld.sshfl [vmem:[#allocation1 + $0x8] sm:$0xff pattern:$0x75316420]
      %s511 = scalar_lea.vmem [#allocation1], 1
      %512 = vst [vmem:[%s511] ss:$2 sm:$0xff] %v225
      %v513 = vld.sshfl [vmem:[#allocation1] sm:$0xff pattern:$0x75316420]
      %v514 = vld.sshfl [vmem:[#allocation1 + $0x8] sm:$0xff pattern:$0x75316420]
      %v517 = vsel %vm429, %v507, %v513
      %v518 = vsel %vm429, %v508, %v514
      %v519 = vadd.f32 %v504, %v517
      %v520 = vadd.f32 %v505, %v518
      %521 = vst [vmem:[%s224] sm:$0xff] %v519
      %522 = vst [vmem:[%s224 + $0x8] sm:$0xff] %v520
      %p523 = scmp.lt.s32.totalorder %s16, 1
      %s524 = scalar_select %p523, %s16, 1
      %s525 = smul.addr %s524, 2
      %s526 = smul.addr %s525, 8
      %s527 = scalar_lea.vmem %s5, %s526
      // Predicated region
      $region41: #{skip_block_up.3} parent=39 // pred_check
        %p528 = pneg %p144
      $region42: #{skip_block_up.3} parent=39 // pred_check_branch
        %530 = sbr.rel (%p528) target = $region44
      $region43: #{skip_block_up.3} parent=39 // pred_region
        _
      $region44: #{skip_block_up.3} parent=39 // pred_fallthru
        _
    $region40: #{skip_block_up.3} parent=5 // pred_fallthru
      _
    %p531 = scmp.le.s32.totalorder 2, %s11
    // Predicated region
    $region45: #{skip_block_up.3} parent=5 // pred_check
      %p532 = pneg %p531
    $region46: #{skip_block_up.3} parent=5 // pred_check_branch
      %534 = sbr.rel (%p532) target = $region48
    $region47: #{skip_block_up.3} parent=5 // pred_region
      %s535 = ssub.s32 %s11, 2
      // Predicated region
      $region49: #{skip_block_up.3} parent=47 // pred_check
        %p536 = pneg %p150
      $region50: #{skip_block_up.3} parent=47 // pred_check_branch
        %538 = sbr.rel (%p536) target = $region52
      $region51: #{skip_block_up.3} parent=47 // pred_region
        %p539 = scmp.lt.s32.totalorder %s17, 1
        %s540 = scalar_select %p539, %s17, 1
        %s541 = smul.addr %s540, 2
        %s542 = smul.addr %s541, 8
        %s543 = scalar_lea.vmem %s5, %s542
      $region52: #{skip_block_up.3} parent=47 // pred_fallthru
        _
    $region48: #{skip_block_up.3} parent=5 // pred_fallthru
      _
  $region6: #{skip_block_up.3} parent=0 // loop_footer
    %s15 = sadd.s32 1, %s11
  $region7: #{skip_block_up.3} parent=0 // loop_footer_branch
    %10 = sbr.rel target = $region3
  $region8: #{skip_block_up.3} parent=0 // loop_exit
    _

</llo_original>
